<compile_context>
chip_gen: v5e
topology: v5e:2x2
jax: 0.10.0
libtpu: 0.0.40
codegen_flags: <defaults>
</compile_context>

<pallas_src>
import math
import functools

import jax
import jax.numpy as jnp
from jax.experimental import pallas as pl
from jax.experimental.pallas import tpu as pltpu


# --------------------------------------------------------------------------- #
# Kernel
# --------------------------------------------------------------------------- #
def _flash_mha_kernel(q_ref, k_ref, v_ref, w_ref, b_ref, o_ref,
                      qh_scr, m_scr, l_scr, acc_scr, *,
                      num_heads, matmul_dtype, exp_dtype, exact_recip):
    """One grid step = (batch block, q tile, kv tile).

    q_ref:   (Bb, tq,  E)   resident across the kv axis
    k_ref:   (Bb, tkv, E)
    v_ref:   (Bb, tkv, E)
    w_ref:   (E, E)         WO^T, single copy, constant index_map
    b_ref:   (1, E)         WO bias
    o_ref:   (Bb, tq, E)    written only on the last kv step
    qh_scr:  (Bb*H, tq, Dh) scaled, head-split q (filled at kv step 0)
    m_scr:   (Bb*H, tq, 1)  running row max        (f32)
    l_scr:   (Bb*H, tq, 1)  running softmax denom  (f32)
    acc_scr: (Bb*H, tq, Dh) running output acc     (f32)
    """
    H = num_heads
    Bb, tq, E = q_ref.shape
    tkv = k_ref.shape[1]
    Dh = E // H
    md = matmul_dtype
    ki = pl.program_id(2)

    def split_heads(x):
        # (Bb, T, E) -> (Bb*H, T, Dh) with bh = b*H + h.  Done with static lane
        # slices + a leading-axis stack (VMEM-only relayout; no HBM traffic and
        # no in-kernel minor-dim transpose).
        parts = [x[:, :, h * Dh:(h + 1) * Dh] for h in range(H)]
        return jnp.stack(parts, axis=1).reshape(Bb * H, x.shape[1], Dh)

    @pl.when(ki == 0)
    def _init():
        # Fold 1/sqrt(Dh) into the small q tile (O(tq*Dh)), cache it across the
        # kv sweep, and reset the online-softmax accumulators.
        scale = 1.0 / math.sqrt(Dh)
        qh_scr[...] = split_heads(q_ref[...] * scale).astype(md)
        m_scr[...] = jnp.full(m_scr.shape, -jnp.inf, jnp.float32)
        l_scr[...] = jnp.zeros(l_scr.shape, jnp.float32)
        acc_scr[...] = jnp.zeros(acc_scr.shape, jnp.float32)

    kh = split_heads(k_ref[...]).astype(md)                    # (Bb*H, tkv, Dh)
    vh = split_heads(v_ref[...]).astype(md)

    # QK^T: batched over (batch, head), contracting the last dim of both
    # operands (k-transpose absorbed into the MXU feed; no XLU transpose).
    s = jnp.einsum("bqd,bkd->bqk", qh_scr[...], kh,
                   preferred_element_type=jnp.float32)         # (Bb*H, tq, tkv)

    # Online (flash) softmax update, statistics kept in f32.
    m_prev = m_scr[...]
    m_new = jnp.maximum(m_prev, jnp.max(s, axis=-1, keepdims=True))
    alpha = jnp.exp(m_prev - m_new)
    # exp in bf16 on v6e/v7x (EUP push count), f32 elsewhere; row-sum in f32.
    p = jnp.exp((s - m_new).astype(exp_dtype))
    l_scr[...] = alpha * l_scr[...] + jnp.sum(p.astype(jnp.float32),
                                              axis=-1, keepdims=True)
    acc_scr[...] = alpha * acc_scr[...] + jnp.einsum(
        "bqk,bkd->bqd", p.astype(md), vh,
        preferred_element_type=jnp.float32)                    # (Bb*H, tq, Dh)
    m_scr[...] = m_new

    @pl.when(ki == pl.num_programs(2) - 1)
    def _finalize():
        l = l_scr[...]
        if exact_recip:
            inv = 1.0 / l                                      # exact f32 path
        else:
            inv = pl.reciprocal(l, approx=True)                # EUP, bf16 path
        att = acc_scr[...] * inv                               # (Bb*H, tq, Dh)

        # Concat heads in VMEM (lane concat) -> single full-depth WO matmul.
        att4 = att.reshape(Bb, H, tq, Dh)
        cat = jnp.concatenate([att4[:, h] for h in range(H)], axis=-1)  # (Bb,tq,E)
        flat = cat.reshape(Bb * tq, E).astype(md)
        proj = jnp.dot(flat, w_ref[...].astype(md),
                       preferred_element_type=jnp.float32)     # (Bb*tq, E)
        out = proj + b_ref[...]
        # NOTE(v5e): with small E (<128) this store is a masked vst; at real
        # sizes keep E a multiple of 128 (or fold S*E onto the lane axis).
        o_ref[...] = out.reshape(Bb, tq, E).astype(o_ref.dtype)


# --------------------------------------------------------------------------- #
# Wrapper
# --------------------------------------------------------------------------- #
def _device_kind():
    # Trace-time query; under AOT / mock compilation pass batch_blocks /
    # q_block / kv_block / exp_dtype explicitly instead of relying on this.
    try:
        return jax.devices()[0].device_kind.lower()
    except Exception:
        return ""


def _pick_tile(n, target):
    """Largest multiple of 8 that divides n and is <= target (or n itself)."""
    if n <= target:
        return n
    t = (target // 8) * 8
    while t >= 8:
        if n % t == 0:
            return t
        t -= 8
    return n


def multi_head_att(q, k, v, w_o, b_o, *, multi_head,
                   batch_blocks=None, q_block=None, kv_block=None,
                   matmul_dtype=jnp.bfloat16, exp_dtype=None,
                   vmem_limit_bytes=None):
    """Pallas implementation of Multi_Head_ATT.forward (dropout=0).

    q, k, v: (B, S, E) float32      (consumed directly; no wrapper head split)
    w_o:     (E, E) torch-layout Linear weight (out_features, in_features)
    b_o:     (E,)   Linear bias
    matmul_dtype: operand dtype for the MXU matmuls (f32 accumulation always).
    """
    B, S, E = q.shape
    H = multi_head
    assert E % H == 0
    Dh = E // H

    kind = _device_kind()
    n_tc = 2 if ("v7" in kind or "tpu7" in kind) else 1   # v7x: 2 TCs / chip

    if batch_blocks is None:
        batch_blocks = n_tc if (n_tc > 1 and B % n_tc == 0) else 1
    assert B % batch_blocks == 0
    Bb = B // batch_blocks

    if q_block is None:
        q_block = _pick_tile(S, 256)
        # v7x with odd/small B: put the 2-way "parallel" split on the q-tile
        # axis instead so neither TensorCore idles.
        if n_tc > 1 and batch_blocks == 1 and (S // q_block) < n_tc \
                and S % (8 * n_tc) == 0:
            q_block = S // n_tc
    if kv_block is None:
        kv_block = _pick_tile(S, 512)
    assert S % q_block == 0 and S % kv_block == 0

    if exp_dtype is None:
        # bf16 exp on v6e/v7x; keep f32 on v5e (no bf16 EUP/VPU path).
        exp_dtype = (jnp.bfloat16
                     if (matmul_dtype == jnp.bfloat16 and "v5" not in kind)
                     else jnp.float32)

    # Single copy of WO^T (E_in, E_out) and bias -- constant index_map below,
    # so only one block is ever DMA'd (no per-batch replication).
    # TODO(synk): on v7x, pipeline_mode=pl.Buffered(1) on these two specs (or a
    # one-shot manual DMA into scratch) halves their VMEM residency.
    w_t = jnp.transpose(w_o)
    b2 = b_o.reshape(1, E)

    grid = (batch_blocks, S // q_block, S // kv_block)

    kernel = functools.partial(
        _flash_mha_kernel,
        num_heads=H,
        matmul_dtype=matmul_dtype,
        exp_dtype=exp_dtype,
        # Approx reciprocal only on the bf16 path; exact divide for f32.
        exact_recip=(matmul_dtype == jnp.float32),
    )

    out = pl.pallas_call(
        kernel,
        out_shape=jax.ShapeDtypeStruct((B, S, E), q.dtype),
        grid_spec=pltpu.PrefetchScalarGridSpec(
            num_scalar_prefetch=0,
            grid=grid,
            in_specs=[
                pl.BlockSpec((Bb, q_block, E), lambda b, qi, ki: (b, qi, 0)),   # q
                pl.BlockSpec((Bb, kv_block, E), lambda b, qi, ki: (b, ki, 0)),  # k
                pl.BlockSpec((Bb, kv_block, E), lambda b, qi, ki: (b, ki, 0)),  # v
                pl.BlockSpec((E, E), lambda b, qi, ki: (0, 0)),                 # WO^T
                pl.BlockSpec((1, E), lambda b, qi, ki: (0, 0)),                 # bias
            ],
            out_specs=pl.BlockSpec((Bb, q_block, E), lambda b, qi, ki: (b, qi, 0)),
            scratch_shapes=[
                pltpu.VMEM((Bb * H, q_block, Dh), matmul_dtype),  # head-split q
                pltpu.VMEM((Bb * H, q_block, 1), jnp.float32),    # running max
                pltpu.VMEM((Bb * H, q_block, 1), jnp.float32),    # running denom
                pltpu.VMEM((Bb * H, q_block, Dh), jnp.float32),   # output acc
            ],
        ),
        compiler_params=pltpu.CompilerParams(
            dimension_semantics=("parallel", "parallel", "arbitrary"),
            vmem_limit_bytes=vmem_limit_bytes,
        ),
    )(q, k, v, w_t, b2)

    return out


# --------------------------------------------------------------------------- #
# Pure-JAX reference (mirrors PyTorch Multi_Head_ATT.forward)
# --------------------------------------------------------------------------- #
def _reference(q, k, v, w_o, b_o, multi_head):
    B, S, E = q.shape
    Dh = E // multi_head
    scale = 1.0 / math.sqrt(Dh)
    qh = q.reshape(B, S, multi_head, Dh).transpose(0, 2, 1, 3)  # (B,H,S,Dh)
    kh = k.reshape(B, S, multi_head, Dh).transpose(0, 2, 1, 3)
    vh = v.reshape(B, S, multi_head, Dh).transpose(0, 2, 1, 3)
    s = jnp.einsum("bhqd,bhkd->bhqk", qh, kh) * scale
    p = jax.nn.softmax(s, axis=-1)
    o = jnp.einsum("bhqk,bhkd->bhqd", p, vh)
    o = o.transpose(0, 2, 1, 3).reshape(B, S, E)
    return o @ w_o.T + b_o


# --------------------------------------------------------------------------- #
# Harness
# --------------------------------------------------------------------------- #
if __name__ == "__main__":
    B, S, E, H = 2, 8, 32, 4   # batch, seq, emb_dim, multi_head

    key = jax.random.PRNGKey(0)
    kq, kk, kv, kw, kb, kq2, kk2, kv2 = jax.random.split(key, 8)
    q = jax.random.normal(kq, (B, S, E), dtype=jnp.float32)
    k = jax.random.normal(kk, (B, S, E), dtype=jnp.float32)
    v = jax.random.normal(kv, (B, S, E), dtype=jnp.float32)
    bound = 1.0 / math.sqrt(E)
    w_o = jax.random.uniform(kw, (E, E), minval=-bound, maxval=bound,
                             dtype=jnp.float32)
    b_o = jax.random.uniform(kb, (E,), minval=-bound, maxval=bound,
                             dtype=jnp.float32)

    ref = _reference(q, k, v, w_o, b_o, H)

    # bf16 matmul operands / f32 accumulation (default MXU path on v6e/v7x).
    out_bf16 = multi_head_att(q, k, v, w_o, b_o, multi_head=H,
                              matmul_dtype=jnp.bfloat16)
    out_bf16 = jax.block_until_ready(out_bf16)
    assert out_bf16.shape == (B, S, E)
    assert jnp.allclose(out_bf16, ref, atol=4e-2, rtol=4e-2), \
        "bf16-matmul kernel mismatch vs reference"

    # f32 matmul operands + exact softmax normalization: tight numerics check.
    out_f32 = multi_head_att(q, k, v, w_o, b_o, multi_head=H,
                             matmul_dtype=jnp.float32)
    out_f32 = jax.block_until_ready(out_f32)
    assert jnp.allclose(out_f32, ref, atol=5e-3, rtol=5e-3), \
        "f32-matmul kernel mismatch vs reference"

    # Multi-tile flash path: batch / q-tile / kv-tile grid = (2, 4, 4),
    # exercising the online-softmax accumulators across kv steps.
    S2 = 32
    q2 = jax.random.normal(kq2, (B, S2, E), dtype=jnp.float32)
    k2 = jax.random.normal(kk2, (B, S2, E), dtype=jnp.float32)
    v2 = jax.random.normal(kv2, (B, S2, E), dtype=jnp.float32)
    ref2 = _reference(q2, k2, v2, w_o, b_o, H)
    out2 = multi_head_att(q2, k2, v2, w_o, b_o, multi_head=H,
                          matmul_dtype=jnp.float32,
                          batch_blocks=2, q_block=8, kv_block=8)
    out2 = jax.block_until_ready(out2)
    assert jnp.allclose(out2, ref2, atol=5e-3, rtol=5e-3), \
        "flash-tiled kernel mismatch vs reference"

    print("KERNEL_OK")
</pallas_src>

<mosaic_0001>
module attributes {stable_mosaic.version = 11 : i64} {
  func.func @_flash_mha_kernel(%arg0: i32, %arg1: i32, %arg2: i32, %arg3: memref<2x8x32xf32, #tpu.memory_space<vmem>>, %arg4: memref<2x8x32xf32, #tpu.memory_space<vmem>>, %arg5: memref<2x8x32xf32, #tpu.memory_space<vmem>>, %arg6: memref<32x32xf32, #tpu.memory_space<vmem>>, %arg7: memref<1x32xf32, #tpu.memory_space<vmem>>, %arg8: memref<2x8x32xf32, #tpu.memory_space<vmem>>, %arg9: memref<8x8x8xbf16, #tpu.memory_space<vmem>>, %arg10: memref<8x8x1xf32, #tpu.memory_space<vmem>>, %arg11: memref<8x8x1xf32, #tpu.memory_space<vmem>>, %arg12: memref<8x8x8xf32, #tpu.memory_space<vmem>>) attributes {dimension_semantics = [#tpu.dimension_semantics<parallel>, #tpu.dimension_semantics<parallel>, #tpu.dimension_semantics<arbitrary>], iteration_bounds = array<i64: 1, 1, 1>, scalar_prefetch = 0 : i64, scratch_operands = 4 : i64, tpu.core_type = #tpu.core_type<tc>, window_params = [{transform_indices = @transform_0, window_bounds = array<i64: 2, 8, 32>}, {transform_indices = @transform_1, window_bounds = array<i64: 2, 8, 32>}, {transform_indices = @transform_2, window_bounds = array<i64: 2, 8, 32>}, {pipeline_mode = #tpu.pipeline_mode<synchronous>, transform_indices = @transform_3, window_bounds = array<i64: 32, 32>}, {pipeline_mode = #tpu.pipeline_mode<synchronous>, transform_indices = @transform_4, window_bounds = array<i64: 1, 32>}, {transform_indices = @transform_5, window_bounds = array<i64: 2, 8, 32>}]} {
    %c0_i32 = arith.constant 0 : i32
    %0 = arith.cmpi eq, %arg2, %c0_i32 : i32
    %1 = arith.extui %0 : i1 to i32
    %c0_i32_0 = arith.constant 0 : i32
    %2 = arith.cmpi ne, %1, %c0_i32_0 : i32
    scf.if %2 {
      %c0_32 = arith.constant 0 : index
      %c0_33 = arith.constant 0 : index
      %c0_34 = arith.constant 0 : index
      %56 = vector.load %arg3[%c0_32, %c0_33, %c0_34] : memref<2x8x32xf32, #tpu.memory_space<vmem>>, vector<2x8x32xf32>
      %cst_35 = arith.constant 0.353553385 : f32
      %57 = vector.broadcast %cst_35 : f32 to vector<2x8x32xf32>
      %58 = arith.mulf %56, %57 : vector<2x8x32xf32>
      %59 = vector.extract_strided_slice %58 {offsets = [0, 0, 0], sizes = [2, 8, 8], strides = [1, 1, 1]} : vector<2x8x32xf32> to vector<2x8x8xf32>
      %60 = vector.extract_strided_slice %58 {offsets = [0, 0, 8], sizes = [2, 8, 8], strides = [1, 1, 1]} : vector<2x8x32xf32> to vector<2x8x8xf32>
      %61 = vector.extract_strided_slice %58 {offsets = [0, 0, 16], sizes = [2, 8, 8], strides = [1, 1, 1]} : vector<2x8x32xf32> to vector<2x8x8xf32>
      %62 = vector.extract_strided_slice %58 {offsets = [0, 0, 24], sizes = [2, 8, 8], strides = [1, 1, 1]} : vector<2x8x32xf32> to vector<2x8x8xf32>
      %63 = vector.shape_cast %59 : vector<2x8x8xf32> to vector<2x1x8x8xf32>
      %64 = vector.shape_cast %60 : vector<2x8x8xf32> to vector<2x1x8x8xf32>
      %65 = vector.shape_cast %61 : vector<2x8x8xf32> to vector<2x1x8x8xf32>
      %66 = vector.shape_cast %62 : vector<2x8x8xf32> to vector<2x1x8x8xf32>
      %67 = tpu.concatenate %63, %64, %65, %66 in 1 : vector<2x1x8x8xf32>, vector<2x1x8x8xf32>, vector<2x1x8x8xf32>, vector<2x1x8x8xf32> -> vector<2x4x8x8xf32>
      %68 = vector.shape_cast %67 : vector<2x4x8x8xf32> to vector<8x8x8xf32>
      %69 = arith.truncf %68 : vector<8x8x8xf32> to vector<8x8x8xbf16>
      %c0_36 = arith.constant 0 : index
      %c0_37 = arith.constant 0 : index
      %c0_38 = arith.constant 0 : index
      %70 = vector.load %arg9[%c0_36, %c0_37, %c0_38] : memref<8x8x8xbf16, #tpu.memory_space<vmem>>, vector<8x8x8xbf16>
      tpu.vector_store %arg9[%c0_36, %c0_37, %c0_38], %69 {strides = array<i32>} : memref<8x8x8xbf16, #tpu.memory_space<vmem>>, vector<8x8x8xbf16>,
      %cst_39 = arith.constant 0xFF800000 : f32
      %71 = vector.broadcast %cst_39 : f32 to vector<8x8x1xf32>
      %c0_40 = arith.constant 0 : index
      %c0_41 = arith.constant 0 : index
      %c0_42 = arith.constant 0 : index
      %72 = vector.load %arg10[%c0_40, %c0_41, %c0_42] : memref<8x8x1xf32, #tpu.memory_space<vmem>>, vector<8x8x1xf32>
      tpu.vector_store %arg10[%c0_40, %c0_41, %c0_42], %71 {strides = array<i32>} : memref<8x8x1xf32, #tpu.memory_space<vmem>>, vector<8x8x1xf32>,
      %cst_43 = arith.constant 0.000000e+00 : f32
      %73 = vector.broadcast %cst_43 : f32 to vector<8x8x1xf32>
      %c0_44 = arith.constant 0 : index
      %c0_45 = arith.constant 0 : index
      %c0_46 = arith.constant 0 : index
      %74 = vector.load %arg11[%c0_44, %c0_45, %c0_46] : memref<8x8x1xf32, #tpu.memory_space<vmem>>, vector<8x8x1xf32>
      tpu.vector_store %arg11[%c0_44, %c0_45, %c0_46], %73 {strides = array<i32>} : memref<8x8x1xf32, #tpu.memory_space<vmem>>, vector<8x8x1xf32>,
      %cst_47 = arith.constant 0.000000e+00 : f32
      %75 = vector.broadcast %cst_47 : f32 to vector<8x8x8xf32>
      %c0_48 = arith.constant 0 : index
      %c0_49 = arith.constant 0 : index
      %c0_50 = arith.constant 0 : index
      %76 = vector.load %arg12[%c0_48, %c0_49, %c0_50] : memref<8x8x8xf32, #tpu.memory_space<vmem>>, vector<8x8x8xf32>
      tpu.vector_store %arg12[%c0_48, %c0_49, %c0_50], %75 {strides = array<i32>} : memref<8x8x8xf32, #tpu.memory_space<vmem>>, vector<8x8x8xf32>,
    } else {
    }
    %c0 = arith.constant 0 : index
    %c0_1 = arith.constant 0 : index
    %c0_2 = arith.constant 0 : index
    %3 = vector.load %arg4[%c0, %c0_1, %c0_2] : memref<2x8x32xf32, #tpu.memory_space<vmem>>, vector<2x8x32xf32>
    %4 = vector.extract_strided_slice %3 {offsets = [0, 0, 0], sizes = [2, 8, 8], strides = [1, 1, 1]} : vector<2x8x32xf32> to vector<2x8x8xf32>
    %5 = vector.extract_strided_slice %3 {offsets = [0, 0, 8], sizes = [2, 8, 8], strides = [1, 1, 1]} : vector<2x8x32xf32> to vector<2x8x8xf32>
    %6 = vector.extract_strided_slice %3 {offsets = [0, 0, 16], sizes = [2, 8, 8], strides = [1, 1, 1]} : vector<2x8x32xf32> to vector<2x8x8xf32>
    %7 = vector.extract_strided_slice %3 {offsets = [0, 0, 24], sizes = [2, 8, 8], strides = [1, 1, 1]} : vector<2x8x32xf32> to vector<2x8x8xf32>
    %8 = vector.shape_cast %4 : vector<2x8x8xf32> to vector<2x1x8x8xf32>
    %9 = vector.shape_cast %5 : vector<2x8x8xf32> to vector<2x1x8x8xf32>
    %10 = vector.shape_cast %6 : vector<2x8x8xf32> to vector<2x1x8x8xf32>
    %11 = vector.shape_cast %7 : vector<2x8x8xf32> to vector<2x1x8x8xf32>
    %12 = tpu.concatenate %8, %9, %10, %11 in 1 : vector<2x1x8x8xf32>, vector<2x1x8x8xf32>, vector<2x1x8x8xf32>, vector<2x1x8x8xf32> -> vector<2x4x8x8xf32>
    %13 = vector.shape_cast %12 : vector<2x4x8x8xf32> to vector<8x8x8xf32>
    %14 = arith.truncf %13 : vector<8x8x8xf32> to vector<8x8x8xbf16>
    %c0_3 = arith.constant 0 : index
    %c0_4 = arith.constant 0 : index
    %c0_5 = arith.constant 0 : index
    %15 = vector.load %arg5[%c0_3, %c0_4, %c0_5] : memref<2x8x32xf32, #tpu.memory_space<vmem>>, vector<2x8x32xf32>
    %16 = vector.extract_strided_slice %15 {offsets = [0, 0, 0], sizes = [2, 8, 8], strides = [1, 1, 1]} : vector<2x8x32xf32> to vector<2x8x8xf32>
    %17 = vector.extract_strided_slice %15 {offsets = [0, 0, 8], sizes = [2, 8, 8], strides = [1, 1, 1]} : vector<2x8x32xf32> to vector<2x8x8xf32>
    %18 = vector.extract_strided_slice %15 {offsets = [0, 0, 16], sizes = [2, 8, 8], strides = [1, 1, 1]} : vector<2x8x32xf32> to vector<2x8x8xf32>
    %19 = vector.extract_strided_slice %15 {offsets = [0, 0, 24], sizes = [2, 8, 8], strides = [1, 1, 1]} : vector<2x8x32xf32> to vector<2x8x8xf32>
    %20 = vector.shape_cast %16 : vector<2x8x8xf32> to vector<2x1x8x8xf32>
    %21 = vector.shape_cast %17 : vector<2x8x8xf32> to vector<2x1x8x8xf32>
    %22 = vector.shape_cast %18 : vector<2x8x8xf32> to vector<2x1x8x8xf32>
    %23 = vector.shape_cast %19 : vector<2x8x8xf32> to vector<2x1x8x8xf32>
    %24 = tpu.concatenate %20, %21, %22, %23 in 1 : vector<2x1x8x8xf32>, vector<2x1x8x8xf32>, vector<2x1x8x8xf32>, vector<2x1x8x8xf32> -> vector<2x4x8x8xf32>
    %25 = vector.shape_cast %24 : vector<2x4x8x8xf32> to vector<8x8x8xf32>
    %26 = arith.truncf %25 : vector<8x8x8xf32> to vector<8x8x8xbf16>
    %c0_6 = arith.constant 0 : index
    %c0_7 = arith.constant 0 : index
    %c0_8 = arith.constant 0 : index
    %27 = vector.load %arg9[%c0_6, %c0_7, %c0_8] : memref<8x8x8xbf16, #tpu.memory_space<vmem>>, vector<8x8x8xbf16>
    "tpu.trace_start"() <{level = 10 : i32, message = "bqd,bkd->bqk"}> : () -> ()
    %cst = arith.constant dense<0.000000e+00> : vector<8x8x8xf32>
    %28 = tpu.matmul %27, %14, %cst {dimension_numbers = #tpu.dot_dimension_numbers<[2], [2], [1], [1], [0, 0, 0, 1, 1, 1], [0], [0]>} : vector<8x8x8xbf16>, vector<8x8x8xbf16>, vector<8x8x8xf32> -> vector<8x8x8xf32>
    "tpu.trace_stop"() : () -> ()
    %c0_9 = arith.constant 0 : index
    %c0_10 = arith.constant 0 : index
    %c0_11 = arith.constant 0 : index
    %29 = vector.load %arg10[%c0_9, %c0_10, %c0_11] : memref<8x8x1xf32, #tpu.memory_space<vmem>>, vector<8x8x1xf32>
    %cst_12 = arith.constant dense<0xFF800000> : vector<8x8xf32>
    %30 = vector.multi_reduction <maximumf>, %28, %cst_12 [2] : vector<8x8x8xf32> to vector<8x8xf32>
    %31 = vector.shape_cast %30 : vector<8x8xf32> to vector<8x8x1xf32>
    %32 = arith.maximumf %29, %31 : vector<8x8x1xf32>
    %33 = arith.subf %29, %32 : vector<8x8x1xf32>
    %34 = math.exp %33 : vector<8x8x1xf32>
    %35 = vector.broadcast %32 : vector<8x8x1xf32> to vector<8x8x8xf32>
    %36 = arith.subf %28, %35 : vector<8x8x8xf32>
    %37 = arith.truncf %36 : vector<8x8x8xf32> to vector<8x8x8xbf16>
    %38 = math.exp %37 : vector<8x8x8xbf16>
    %c0_13 = arith.constant 0 : index
    %c0_14 = arith.constant 0 : index
    %c0_15 = arith.constant 0 : index
    %39 = vector.load %arg11[%c0_13, %c0_14, %c0_15] : memref<8x8x1xf32, #tpu.memory_space<vmem>>, vector<8x8x1xf32>
    %40 = arith.mulf %34, %39 : vector<8x8x1xf32>
    %41 = arith.extf %38 : vector<8x8x8xbf16> to vector<8x8x8xf32>
    %cst_16 = arith.constant dense<0.000000e+00> : vector<8x8xf32>
    %42 = vector.multi_reduction <add>, %41, %cst_16 [2] : vector<8x8x8xf32> to vector<8x8xf32>
    %43 = vector.shape_cast %42 : vector<8x8xf32> to vector<8x8x1xf32>
    %44 = arith.addf %40, %43 : vector<8x8x1xf32>
    %c0_17 = arith.constant 0 : index
    %c0_18 = arith.constant 0 : index
    %c0_19 = arith.constant 0 : index
    %45 = vector.load %arg11[%c0_17, %c0_18, %c0_19] : memref<8x8x1xf32, #tpu.memory_space<vmem>>, vector<8x8x1xf32>
    tpu.vector_store %arg11[%c0_17, %c0_18, %c0_19], %44 {strides = array<i32>} : memref<8x8x1xf32, #tpu.memory_space<vmem>>, vector<8x8x1xf32>,
    %c0_20 = arith.constant 0 : index
    %c0_21 = arith.constant 0 : index
    %c0_22 = arith.constant 0 : index
    %46 = vector.load %arg12[%c0_20, %c0_21, %c0_22] : memref<8x8x8xf32, #tpu.memory_space<vmem>>, vector<8x8x8xf32>
    %47 = vector.broadcast %34 : vector<8x8x1xf32> to vector<8x8x8xf32>
    %48 = arith.mulf %47, %46 : vector<8x8x8xf32>
    "tpu.trace_start"() <{level = 10 : i32, message = "bqk,bkd->bqd"}> : () -> ()
    %cst_23 = arith.constant dense<0.000000e+00> : vector<8x8x8xf32>
    %49 = tpu.matmul %38, %26, %cst_23 {dimension_numbers = #tpu.dot_dimension_numbers<[2], [1], [1], [2], [0, 0, 0, 1, 1, 2], [0], [0]>} : vector<8x8x8xbf16>, vector<8x8x8xbf16>, vector<8x8x8xf32> -> vector<8x8x8xf32>
    "tpu.trace_stop"() : () -> ()
    %50 = arith.addf %48, %49 : vector<8x8x8xf32>
    %c0_24 = arith.constant 0 : index
    %c0_25 = arith.constant 0 : index
    %c0_26 = arith.constant 0 : index
    %51 = vector.load %arg12[%c0_24, %c0_25, %c0_26] : memref<8x8x8xf32, #tpu.memory_space<vmem>>, vector<8x8x8xf32>
    tpu.vector_store %arg12[%c0_24, %c0_25, %c0_26], %50 {strides = array<i32>} : memref<8x8x8xf32, #tpu.memory_space<vmem>>, vector<8x8x8xf32>,
    %c0_27 = arith.constant 0 : index
    %c0_28 = arith.constant 0 : index
    %c0_29 = arith.constant 0 : index
    %52 = vector.load %arg10[%c0_27, %c0_28, %c0_29] : memref<8x8x1xf32, #tpu.memory_space<vmem>>, vector<8x8x1xf32>
    tpu.vector_store %arg10[%c0_27, %c0_28, %c0_29], %32 {strides = array<i32>} : memref<8x8x1xf32, #tpu.memory_space<vmem>>, vector<8x8x1xf32>,
    %c0_i32_30 = arith.constant 0 : i32
    %53 = arith.cmpi eq, %arg2, %c0_i32_30 : i32
    %54 = arith.extui %53 : i1 to i32
    %c0_i32_31 = arith.constant 0 : i32
    %55 = arith.cmpi ne, %54, %c0_i32_31 : i32
    scf.if %55 {
      %c0_32 = arith.constant 0 : index
      %c0_33 = arith.constant 0 : index
      %c0_34 = arith.constant 0 : index
      %56 = vector.load %arg11[%c0_32, %c0_33, %c0_34] : memref<8x8x1xf32, #tpu.memory_space<vmem>>, vector<8x8x1xf32>
      %57 = tpu.reciprocal %56 {approx = true} : vector<8x8x1xf32> -> vector<8x8x1xf32>
      %c0_35 = arith.constant 0 : index
      %c0_36 = arith.constant 0 : index
      %c0_37 = arith.constant 0 : index
      %58 = vector.load %arg12[%c0_35, %c0_36, %c0_37] : memref<8x8x8xf32, #tpu.memory_space<vmem>>, vector<8x8x8xf32>
      %59 = vector.broadcast %57 : vector<8x8x1xf32> to vector<8x8x8xf32>
      %60 = arith.mulf %58, %59 : vector<8x8x8xf32>
      %61 = vector.shape_cast %60 : vector<8x8x8xf32> to vector<2x4x8x8xf32>
      %62 = vector.extract_strided_slice %61 {offsets = [0, 0, 0, 0], sizes = [2, 1, 8, 8], strides = [1, 1, 1, 1]} : vector<2x4x8x8xf32> to vector<2x1x8x8xf32>
      %63 = vector.shape_cast %62 : vector<2x1x8x8xf32> to vector<2x8x8xf32>
      %64 = vector.extract_strided_slice %61 {offsets = [0, 1, 0, 0], sizes = [2, 1, 8, 8], strides = [1, 1, 1, 1]} : vector<2x4x8x8xf32> to vector<2x1x8x8xf32>
      %65 = vector.shape_cast %64 : vector<2x1x8x8xf32> to vector<2x8x8xf32>
      %66 = vector.extract_strided_slice %61 {offsets = [0, 2, 0, 0], sizes = [2, 1, 8, 8], strides = [1, 1, 1, 1]} : vector<2x4x8x8xf32> to vector<2x1x8x8xf32>
      %67 = vector.shape_cast %66 : vector<2x1x8x8xf32> to vector<2x8x8xf32>
      %68 = vector.extract_strided_slice %61 {offsets = [0, 3, 0, 0], sizes = [2, 1, 8, 8], strides = [1, 1, 1, 1]} : vector<2x4x8x8xf32> to vector<2x1x8x8xf32>
      %69 = vector.shape_cast %68 : vector<2x1x8x8xf32> to vector<2x8x8xf32>
      %70 = tpu.concatenate %63, %65, %67, %69 in 2 : vector<2x8x8xf32>, vector<2x8x8xf32>, vector<2x8x8xf32>, vector<2x8x8xf32> -> vector<2x8x32xf32>
      %71 = vector.shape_cast %70 : vector<2x8x32xf32> to vector<16x32xf32>
      %72 = arith.truncf %71 : vector<16x32xf32> to vector<16x32xbf16>
      %c0_38 = arith.constant 0 : index
      %c0_39 = arith.constant 0 : index
      %73 = vector.load %arg6[%c0_38, %c0_39] : memref<32x32xf32, #tpu.memory_space<vmem>>, vector<32x32xf32>
      %74 = arith.truncf %73 : vector<32x32xf32> to vector<32x32xbf16>
      %cst_40 = arith.constant dense<0.000000e+00> : vector<16x32xf32>
      %75 = tpu.matmul %72, %74, %cst_40 {dimension_numbers = #tpu.dot_dimension_numbers<[1], [0], [0], [1], [0, 0, 1, 1], [], []>} : vector<16x32xbf16>, vector<32x32xbf16>, vector<16x32xf32> -> vector<16x32xf32>
      %c0_41 = arith.constant 0 : index
      %c0_42 = arith.constant 0 : index
      %76 = vector.load %arg7[%c0_41, %c0_42] : memref<1x32xf32, #tpu.memory_space<vmem>>, vector<1x32xf32>
      %77 = vector.broadcast %76 : vector<1x32xf32> to vector<16x32xf32>
      %78 = arith.addf %75, %77 : vector<16x32xf32>
      %79 = vector.shape_cast %78 : vector<16x32xf32> to vector<2x8x32xf32>
      %c0_43 = arith.constant 0 : index
      %c0_44 = arith.constant 0 : index
      %c0_45 = arith.constant 0 : index
      %80 = vector.load %arg8[%c0_43, %c0_44, %c0_45] : memref<2x8x32xf32, #tpu.memory_space<vmem>>, vector<2x8x32xf32>
      tpu.vector_store %arg8[%c0_43, %c0_44, %c0_45], %79 {strides = array<i32>} : memref<2x8x32xf32, #tpu.memory_space<vmem>>, vector<2x8x32xf32>,
    } else {
    }
    return
  }
  func.func @transform_0(%arg0: i32, %arg1: i32, %arg2: i32) -> (i32, i32, i32) {
    %c0_i32 = arith.constant 0 : i32
    %c0_i32_0 = arith.constant 0 : i32
    return %arg0, %arg1, %c0_i32 : i32, i32, i32
  }
  func.func @transform_1(%arg0: i32, %arg1: i32, %arg2: i32) -> (i32, i32, i32) {
    %c0_i32 = arith.constant 0 : i32
    %c0_i32_0 = arith.constant 0 : i32
    return %arg0, %arg2, %c0_i32 : i32, i32, i32
  }
  func.func @transform_2(%arg0: i32, %arg1: i32, %arg2: i32) -> (i32, i32, i32) {
    %c0_i32 = arith.constant 0 : i32
    %c0_i32_0 = arith.constant 0 : i32
    return %arg0, %arg2, %c0_i32 : i32, i32, i32
  }
  func.func @transform_3(%arg0: i32, %arg1: i32, %arg2: i32) -> (i32, i32) {
    %c0_i32 = arith.constant 0 : i32
    %c0_i32_0 = arith.constant 0 : i32
    %c0_i32_1 = arith.constant 0 : i32
    return %c0_i32, %c0_i32_0 : i32, i32
  }
  func.func @transform_4(%arg0: i32, %arg1: i32, %arg2: i32) -> (i32, i32) {
    %c0_i32 = arith.constant 0 : i32
    %c0_i32_0 = arith.constant 0 : i32
    %c0_i32_1 = arith.constant 0 : i32
    return %c0_i32, %c0_i32_0 : i32, i32
  }
  func.func @transform_5(%arg0: i32, %arg1: i32, %arg2: i32) -> (i32, i32, i32) {
    %c0_i32 = arith.constant 0 : i32
    %c0_i32_0 = arith.constant 0 : i32
    return %arg0, %arg1, %c0_i32 : i32, i32, i32
  }
}

</mosaic_0001>

<llo_original>
// kernel: tpu_custom_call.1
$region0: #{tpu_custom_call.1}
  #allocation0 [shape = 'u32[]', space=smem, size = 0x4, offset = 0x4, fixed_abs, tag = 'smem constant byte address 0x4 - core index']
  #allocation1 [shape = 'u32[72,128]{1,0:T(1,128)}', space=vmem, size = 0x9000, scoped, tag = 'internal scratch']
  #allocation2 [shape = 'bf16[8,8,8]{2,1,0:T(8,128)(2,1)}', space=vmem, size = 0x4000, scoped, tag = 'scratch operand']
  #allocation3 [shape = 'f32[8,8,1]{2,1,0:T(8,128)}', space=vmem, size = 0x8000, scoped, tag = 'scratch operand']
  #allocation4 [shape = 'f32[8,8,1]{2,1,0:T(8,128)}', space=vmem, size = 0x8000, scoped, tag = 'scratch operand']
  #allocation5 [shape = 'f32[8,8,8]{2,1,0:T(8,128)}', space=vmem, size = 0x8000, scoped, tag = 'scratch operand']
  %s0 = inlined_call_operand.hbm [shape: f32[2,8,32], index: 0, kind: input, shape index: {}]
  %s1 = inlined_call_operand.hbm [shape: f32[2,8,32], index: 1, kind: input, shape index: {}]
  %s2 = inlined_call_operand.hbm [shape: f32[2,8,32], index: 2, kind: input, shape index: {}]
  %s3 = inlined_call_operand.hbm [shape: f32[32,32], index: 3, kind: input, shape index: {}]
  %s4 = inlined_call_operand.vmem [shape: f32[1,32], index: 4, kind: input, shape index: {}]
  %s5 = inlined_call_operand.hbm [shape: f32[2,8,32], index: 5, kind: output, shape index: {}]
  %s6 = sld [smem:[#allocation0]]
  $region54: #{tpu_custom_call.1} parent=0
    _
  %s8 = ssub.s32 1, %s6
  %s9 = scalar_select 0, %s8, %s6
  $region1: #{tpu_custom_call.1} parent=0
    #allocation6 [shape = 'u8[8192]{0}', space=vmem, size = 0x2000, scoped, tag = 'input window, operand 0, single buffered']
    #allocation7 [shape = 's32[1]{0}', space=sflag, size = 0x4, scoped, tag = 'scoped memory for tpu_custom_call.1']
    #allocation8 [shape = 's32[1]{0}', space=sflag, size = 0x4, scoped, tag = 'scoped memory for tpu_custom_call.1']
    #allocation9 [shape = 'u8[8192]{0}', space=vmem, size = 0x2000, scoped, tag = 'input window, operand 1, single buffered']
    #allocation10 [shape = 's32[1]{0}', space=sflag, size = 0x4, scoped, tag = 'scoped memory for tpu_custom_call.1']
    #allocation11 [shape = 'u8[8192]{0}', space=vmem, size = 0x2000, scoped, tag = 'input window, operand 2, single buffered']
    #allocation12 [shape = 'u8[16384]{0}', space=vmem, size = 0x4000, scoped, tag = 'input window, operand 3, single buffered']
    #allocation13 [shape = 's32[1]{0}', space=sflag, size = 0x4, scoped, tag = 'scoped memory for tpu_custom_call.1']
    #allocation14 [shape = 'u8[8192]{0}', space=vmem, size = 0x2000, scoped, tag = 'output window, operand 0, single buffered']
    %10 = vsyncpa [#allocation7], 0
    %11 = vsyncpa [#allocation10], 0
    %12 = vsyncpa [#allocation13], 0
    %13 = vsyncpa [#allocation8], 0
    // Predicated region
    $region2: #{tpu_custom_call.1} parent=1 // pred_check
      _
    $region3: #{tpu_custom_call.1} parent=1 // pred_check_branch
      %15 = sbr.rel (0) target = $region5
    $region4: #{tpu_custom_call.1} parent=1 // pred_region
      %17 = vsyncadd [#allocation7], 0
      %s18 = sshll.u32 %s0, 4
      %s19 = int_to_ptr.hbm [resolvable:$true] %s18
      %s20 = sshll.u32 [#allocation6], 4
      %s21 = int_to_ptr.vmem [resolvable:$true] %s20
      %26 = dma.hbm_to_vmem [thread:$0]  %s19, 256, %s21, [#allocation7], 128, 128, 8
    $region5: #{tpu_custom_call.1} parent=1 // pred_fallthru
      _
    // Predicated region
    $region6: #{tpu_custom_call.1} parent=1 // pred_check
      _
    $region7: #{tpu_custom_call.1} parent=1 // pred_check_branch
      %28 = sbr.rel (0) target = $region9
    $region8: #{tpu_custom_call.1} parent=1 // pred_region
      %30 = vsyncadd [#allocation10], 0
      %s31 = sshll.u32 %s1, 4
      %s32 = int_to_ptr.hbm [resolvable:$true] %s31
      %s33 = sshll.u32 [#allocation9], 4
      %s34 = int_to_ptr.vmem [resolvable:$true] %s33
      %39 = dma.hbm_to_vmem [thread:$0]  %s32, 256, %s34, [#allocation10], 128, 128, 8
    $region9: #{tpu_custom_call.1} parent=1 // pred_fallthru
      _
    // Predicated region
    $region10: #{tpu_custom_call.1} parent=1 // pred_check
      _
    $region11: #{tpu_custom_call.1} parent=1 // pred_check_branch
      %41 = sbr.rel (0) target = $region13
    $region12: #{tpu_custom_call.1} parent=1 // pred_region
      %43 = vsyncadd [#allocation10], 0
      %s44 = sshll.u32 %s2, 4
      %s45 = int_to_ptr.hbm [resolvable:$true] %s44
      %s46 = sshll.u32 [#allocation11], 4
      %s47 = int_to_ptr.vmem [resolvable:$true] %s46
      %52 = dma.hbm_to_vmem [thread:$0]  %s45, 256, %s47, [#allocation10], 128, 128, 8
    $region13: #{tpu_custom_call.1} parent=1 // pred_fallthru
      _
    // Predicated region
    $region14: #{tpu_custom_call.1} parent=1 // pred_check
      _
    $region15: #{tpu_custom_call.1} parent=1 // pred_check_branch
      %54 = sbr.rel (0) target = $region17
    $region16: #{tpu_custom_call.1} parent=1 // pred_region
      %56 = vsyncadd [#allocation13], 0
      %s57 = sshll.u32 %s3, 4
      %s58 = int_to_ptr.hbm [resolvable:$true] %s57
      %s59 = sshll.u32 [#allocation12], 4
      %s60 = int_to_ptr.vmem [resolvable:$true] %s59
      %65 = dma.hbm_to_vmem [thread:$0]  %s58, 512, %s60, [#allocation13], 128, 128, 8
    $region17: #{tpu_custom_call.1} parent=1 // pred_fallthru
      _
    // Predicated region
    $region18: #{tpu_custom_call.1} parent=1 // pred_check
      _
    $region19: #{tpu_custom_call.1} parent=1 // pred_check_branch
      %67 = sbr.rel (0) target = $region21
    $region20: #{tpu_custom_call.1} parent=1 // pred_region
      _
    $region21: #{tpu_custom_call.1} parent=1 // pred_fallthru
      _
    // Predicated region
    $region22: #{tpu_custom_call.1} parent=1 // pred_check
      _
    $region23: #{tpu_custom_call.1} parent=1 // pred_check_branch
      %69 = sbr.rel (0) target = $region25
    $region24: #{tpu_custom_call.1} parent=1 // pred_region
      %71 = dma.done [#allocation7], 256
    $region25: #{tpu_custom_call.1} parent=1 // pred_fallthru
      _
    // Predicated region
    $region26: #{tpu_custom_call.1} parent=1 // pred_check
      _
    $region27: #{tpu_custom_call.1} parent=1 // pred_check_branch
      %73 = sbr.rel (0) target = $region29
    $region28: #{tpu_custom_call.1} parent=1 // pred_region
      %75 = dma.done [#allocation10], 256
    $region29: #{tpu_custom_call.1} parent=1 // pred_fallthru
      _
    // Predicated region
    $region30: #{tpu_custom_call.1} parent=1 // pred_check
      _
    $region31: #{tpu_custom_call.1} parent=1 // pred_check_branch
      %77 = sbr.rel (0) target = $region33
    $region32: #{tpu_custom_call.1} parent=1 // pred_region
      %79 = dma.done [#allocation10], 256
    $region33: #{tpu_custom_call.1} parent=1 // pred_fallthru
      _
    // Predicated region
    $region34: #{tpu_custom_call.1} parent=1 // pred_check
      _
    $region35: #{tpu_custom_call.1} parent=1 // pred_check_branch
      %81 = sbr.rel (0) target = $region37
    $region36: #{tpu_custom_call.1} parent=1 // pred_region
      %83 = dma.done [#allocation13], 512
    $region37: #{tpu_custom_call.1} parent=1 // pred_fallthru
      _
    %p85 = scmp.eq.s32.totalorder 0, 0
    // Predicated region
    $region38: #{tpu_custom_call.1} parent=1 // pred_check
      %p86 = pneg %p85
    $region39: #{tpu_custom_call.1} parent=1 // pred_check_branch
      %88 = sbr.rel (%p86) target = $region41
    $region40: #{tpu_custom_call.1} parent=1 // pred_region
      %v89 = vld [vmem:[#allocation6] sm:$0xff]
      %v90 = vld [vmem:[#allocation6 + $0x8] sm:$0xff]
      %v91 = vmul.f32 %v89, 0.35355338
      %v92 = vmul.f32 %v90, 0.35355338
      %95 = vrot.lane.b32.xlu0 %v91, 120
      %v96 = vpop.permute.xlu0 %95
      %97 = vrot.lane.b32.xlu0 %v92, 120
      %v98 = vpop.permute.xlu0 %97
      %101 = vrot.lane.b32.xlu0 %v91, 112
      %v102 = vpop.permute.xlu0 %101
      %103 = vrot.lane.b32.xlu0 %v92, 112
      %v104 = vpop.permute.xlu0 %103
      %107 = vrot.lane.b32.xlu0 %v91, 104
      %v108 = vpop.permute.xlu0 %107
      %109 = vrot.lane.b32.xlu0 %v92, 104
      %v110 = vpop.permute.xlu0 %109
      %v113 = vpack.c.bf16 %v91, %v91
      %v114 = vpack.c.bf16 %v96, %v96
      %v115 = vpack.c.bf16 %v102, %v102
      %v116 = vpack.c.bf16 %v108, %v108
      %v117 = vpack.c.bf16 %v92, %v92
      %v118 = vpack.c.bf16 %v98, %v98
      %v119 = vpack.c.bf16 %v104, %v104
      %v120 = vpack.c.bf16 %v110, %v110
      %vm121 = vcmask 60416
      %122 = vst.msk [vmem:[#allocation2] sm:$0xf] %vm121, %v113
      %123 = vst.msk [vmem:[#allocation2 + $0x4] sm:$0xf] %vm121, %v114
      %124 = vst.msk [vmem:[#allocation2 + $0x8] sm:$0xf] %vm121, %v115
      %125 = vst.msk [vmem:[#allocation2 + $0xc] sm:$0xf] %vm121, %v116
      %126 = vst.msk [vmem:[#allocation2 + $0x10] sm:$0xf] %vm121, %v117
      %127 = vst.msk [vmem:[#allocation2 + $0x14] sm:$0xf] %vm121, %v118
      %128 = vst.msk [vmem:[#allocation2 + $0x18] sm:$0xf] %vm121, %v119
      %129 = vst.msk [vmem:[#allocation2 + $0x1c] sm:$0xf] %vm121, %v120
      %vm130 = vcmask 7168
      %131 = vst.msk [vmem:[#allocation3] sm:$0xff] %vm130, -inf
      %132 = vst.msk [vmem:[#allocation3 + $0x8] sm:$0xff] %vm130, -inf
      %133 = vst.msk [vmem:[#allocation3 + $0x10] sm:$0xff] %vm130, -inf
      %134 = vst.msk [vmem:[#allocation3 + $0x18] sm:$0xff] %vm130, -inf
      %135 = vst.msk [vmem:[#allocation3 + $0x20] sm:$0xff] %vm130, -inf
      %136 = vst.msk [vmem:[#allocation3 + $0x28] sm:$0xff] %vm130, -inf
      %137 = vst.msk [vmem:[#allocation3 + $0x30] sm:$0xff] %vm130, -inf
      %138 = vst.msk [vmem:[#allocation3 + $0x38] sm:$0xff] %vm130, -inf
      %139 = vst.msk [vmem:[#allocation4] sm:$0xff] %vm130, 0.0
      %140 = vst.msk [vmem:[#allocation4 + $0x8] sm:$0xff] %vm130, 0.0
      %141 = vst.msk [vmem:[#allocation4 + $0x10] sm:$0xff] %vm130, 0.0
      %142 = vst.msk [vmem:[#allocation4 + $0x18] sm:$0xff] %vm130, 0.0
      %143 = vst.msk [vmem:[#allocation4 + $0x20] sm:$0xff] %vm130, 0.0
      %144 = vst.msk [vmem:[#allocation4 + $0x28] sm:$0xff] %vm130, 0.0
      %145 = vst.msk [vmem:[#allocation4 + $0x30] sm:$0xff] %vm130, 0.0
      %146 = vst.msk [vmem:[#allocation4 + $0x38] sm:$0xff] %vm130, 0.0
      %vm147 = vcmask 64512
      %148 = vst.msk [vmem:[#allocation5] sm:$0xff] %vm147, 0.0
      %149 = vst.msk [vmem:[#allocation5 + $0x8] sm:$0xff] %vm147, 0.0
      %150 = vst.msk [vmem:[#allocation5 + $0x10] sm:$0xff] %vm147, 0.0
      %151 = vst.msk [vmem:[#allocation5 + $0x18] sm:$0xff] %vm147, 0.0
      %152 = vst.msk [vmem:[#allocation5 + $0x20] sm:$0xff] %vm147, 0.0
      %153 = vst.msk [vmem:[#allocation5 + $0x28] sm:$0xff] %vm147, 0.0
      %154 = vst.msk [vmem:[#allocation5 + $0x30] sm:$0xff] %vm147, 0.0
      %155 = vst.msk [vmem:[#allocation5 + $0x38] sm:$0xff] %vm147, 0.0
    $region41: #{tpu_custom_call.1} parent=1 // pred_fallthru
      _
    %v156 = vld [vmem:[#allocation9] sm:$0xff]
    %v157 = vld [vmem:[#allocation9 + $0x8] sm:$0xff]
    %160 = vrot.lane.b32.xlu0 %v156, 120
    %v161 = vpop.permute.xlu0 %160
    %162 = vrot.lane.b32.xlu0 %v157, 120
    %v163 = vpop.permute.xlu0 %162
    %166 = vrot.lane.b32.xlu0 %v156, 112
    %v167 = vpop.permute.xlu0 %166
    %168 = vrot.lane.b32.xlu0 %v157, 112
    %v169 = vpop.permute.xlu0 %168
    %172 = vrot.lane.b32.xlu0 %v156, 104
    %v173 = vpop.permute.xlu0 %172
    %174 = vrot.lane.b32.xlu0 %v157, 104
    %v175 = vpop.permute.xlu0 %174
    %v178 = vpack.c.bf16 %v156, %v156
    %v179 = vpack.c.bf16 %v161, %v161
    %v180 = vpack.c.bf16 %v167, %v167
    %v181 = vpack.c.bf16 %v173, %v173
    %v182 = vpack.c.bf16 %v157, %v157
    %v183 = vpack.c.bf16 %v163, %v163
    %v184 = vpack.c.bf16 %v169, %v169
    %v185 = vpack.c.bf16 %v175, %v175
    %v186 = vld [vmem:[#allocation11] sm:$0xff]
    %v187 = vld [vmem:[#allocation11 + $0x8] sm:$0xff]
    %190 = vrot.lane.b32.xlu0 %v186, 120
    %v191 = vpop.permute.xlu0 %190
    %192 = vrot.lane.b32.xlu0 %v187, 120
    %v193 = vpop.permute.xlu0 %192
    %196 = vrot.lane.b32.xlu0 %v186, 112
    %v197 = vpop.permute.xlu0 %196
    %198 = vrot.lane.b32.xlu0 %v187, 112
    %v199 = vpop.permute.xlu0 %198
    %202 = vrot.lane.b32.xlu0 %v186, 104
    %v203 = vpop.permute.xlu0 %202
    %204 = vrot.lane.b32.xlu0 %v187, 104
    %v205 = vpop.permute.xlu0 %204
    %v208 = vpack.c.bf16 %v186, %v186
    %v209 = vpack.c.bf16 %v191, %v191
    %v210 = vpack.c.bf16 %v197, %v197
    %v211 = vpack.c.bf16 %v203, %v203
    %v212 = vpack.c.bf16 %v187, %v187
    %v213 = vpack.c.bf16 %v193, %v193
    %v214 = vpack.c.bf16 %v199, %v199
    %v215 = vpack.c.bf16 %v205, %v205
    %v216 = vld [vmem:[#allocation2] sm:$0xf]
    %v217 = vld [vmem:[#allocation2 + $0x4] sm:$0xf]
    %v218 = vld [vmem:[#allocation2 + $0x8] sm:$0xf]
    %v219 = vld [vmem:[#allocation2 + $0xc] sm:$0xf]
    %v220 = vld [vmem:[#allocation2 + $0x10] sm:$0xf]
    %v221 = vld [vmem:[#allocation2 + $0x14] sm:$0xf]
    %v222 = vld [vmem:[#allocation2 + $0x18] sm:$0xf]
    %v223 = vld [vmem:[#allocation2 + $0x1c] sm:$0xf]
    %vm224 = vcmask 64512
    %v226 = vsel %vm224, %v216, 0
    %v229 = vsel %vm224, %v178, 0
    %231 = vmatpush.bf16.xpose.msra.mxu0 0
    %232 = vmatpush.bf16.xpose.msra.mxu0 0
    %233 = vmatpush.bf16.xpose.msra.mxu0 0
    %234 = vmatpush.bf16.xpose.msra.mxu0 0
    %235 = vmatpush.bf16.xpose.msra.mxu0 0
    %236 = vmatpush.bf16.xpose.msra.mxu0 0
    %237 = vmatpush.bf16.xpose.msra.mxu0 0
    %238 = vmatpush.bf16.xpose.msra.mxu0 %v229
    %239 = vmatmul.bf16.gmra.mxu0 %v226
    %v240 = vpop.f32.mrf.mxu0
    %v241 = vadd.f32 0.0, %v240
    %v242 = vpop.f32.mrf.mxu0
    %243 = vdwg.mxu0
    %v245 = vsel %vm224, %v217, 0
    %v248 = vsel %vm224, %v179, 0
    %250 = vmatpush.bf16.xpose.msra.mxu0 0
    %251 = vmatpush.bf16.xpose.msra.mxu0 0
    %252 = vmatpush.bf16.xpose.msra.mxu0 0
    %253 = vmatpush.bf16.xpose.msra.mxu0 0
    %254 = vmatpush.bf16.xpose.msra.mxu0 0
    %255 = vmatpush.bf16.xpose.msra.mxu0 0
    %256 = vmatpush.bf16.xpose.msra.mxu0 0
    %257 = vmatpush.bf16.xpose.msra.mxu0 %v248
    %258 = vmatmul.bf16.gmra.mxu0 %v245
    %v259 = vpop.f32.mrf.mxu0
    %v260 = vadd.f32 0.0, %v259
    %v261 = vpop.f32.mrf.mxu0
    %262 = vdwg.mxu0
    %v264 = vsel %vm224, %v218, 0
    %v267 = vsel %vm224, %v180, 0
    %269 = vmatpush.bf16.xpose.msra.mxu0 0
    %270 = vmatpush.bf16.xpose.msra.mxu0 0
    %271 = vmatpush.bf16.xpose.msra.mxu0 0
    %272 = vmatpush.bf16.xpose.msra.mxu0 0
    %273 = vmatpush.bf16.xpose.msra.mxu0 0
    %274 = vmatpush.bf16.xpose.msra.mxu0 0
    %275 = vmatpush.bf16.xpose.msra.mxu0 0
    %276 = vmatpush.bf16.xpose.msra.mxu0 %v267
    %277 = vmatmul.bf16.gmra.mxu0 %v264
    %v278 = vpop.f32.mrf.mxu0
    %v279 = vadd.f32 0.0, %v278
    %v280 = vpop.f32.mrf.mxu0
    %281 = vdwg.mxu0
    %v283 = vsel %vm224, %v219, 0
    %v286 = vsel %vm224, %v181, 0
    %288 = vmatpush.bf16.xpose.msra.mxu0 0
    %289 = vmatpush.bf16.xpose.msra.mxu0 0
    %290 = vmatpush.bf16.xpose.msra.mxu0 0
    %291 = vmatpush.bf16.xpose.msra.mxu0 0
    %292 = vmatpush.bf16.xpose.msra.mxu0 0
    %293 = vmatpush.bf16.xpose.msra.mxu0 0
    %294 = vmatpush.bf16.xpose.msra.mxu0 0
    %295 = vmatpush.bf16.xpose.msra.mxu0 %v286
    %296 = vmatmul.bf16.gmra.mxu0 %v283
    %v297 = vpop.f32.mrf.mxu0
    %v298 = vadd.f32 0.0, %v297
    %v299 = vpop.f32.mrf.mxu0
    %300 = vdwg.mxu0
    %v302 = vsel %vm224, %v220, 0
    %v305 = vsel %vm224, %v182, 0
    %307 = vmatpush.bf16.xpose.msra.mxu0 0
    %308 = vmatpush.bf16.xpose.msra.mxu0 0
    %309 = vmatpush.bf16.xpose.msra.mxu0 0
    %310 = vmatpush.bf16.xpose.msra.mxu0 0
    %311 = vmatpush.bf16.xpose.msra.mxu0 0
    %312 = vmatpush.bf16.xpose.msra.mxu0 0
    %313 = vmatpush.bf16.xpose.msra.mxu0 0
    %314 = vmatpush.bf16.xpose.msra.mxu0 %v305
    %315 = vmatmul.bf16.gmra.mxu0 %v302
    %v316 = vpop.f32.mrf.mxu0
    %v317 = vadd.f32 0.0, %v316
    %v318 = vpop.f32.mrf.mxu0
    %319 = vdwg.mxu0
    %v321 = vsel %vm224, %v221, 0
    %v324 = vsel %vm224, %v183, 0
    %326 = vmatpush.bf16.xpose.msra.mxu0 0
    %327 = vmatpush.bf16.xpose.msra.mxu0 0
    %328 = vmatpush.bf16.xpose.msra.mxu0 0
    %329 = vmatpush.bf16.xpose.msra.mxu0 0
    %330 = vmatpush.bf16.xpose.msra.mxu0 0
    %331 = vmatpush.bf16.xpose.msra.mxu0 0
    %332 = vmatpush.bf16.xpose.msra.mxu0 0
    %333 = vmatpush.bf16.xpose.msra.mxu0 %v324
    %334 = vmatmul.bf16.gmra.mxu0 %v321
    %v335 = vpop.f32.mrf.mxu0
    %v336 = vadd.f32 0.0, %v335
    %v337 = vpop.f32.mrf.mxu0
    %338 = vdwg.mxu0
    %v340 = vsel %vm224, %v222, 0
    %v343 = vsel %vm224, %v184, 0
    %345 = vmatpush.bf16.xpose.msra.mxu0 0
    %346 = vmatpush.bf16.xpose.msra.mxu0 0
    %347 = vmatpush.bf16.xpose.msra.mxu0 0
    %348 = vmatpush.bf16.xpose.msra.mxu0 0
    %349 = vmatpush.bf16.xpose.msra.mxu0 0
    %350 = vmatpush.bf16.xpose.msra.mxu0 0
    %351 = vmatpush.bf16.xpose.msra.mxu0 0
    %352 = vmatpush.bf16.xpose.msra.mxu0 %v343
    %353 = vmatmul.bf16.gmra.mxu0 %v340
    %v354 = vpop.f32.mrf.mxu0
    %v355 = vadd.f32 0.0, %v354
    %v356 = vpop.f32.mrf.mxu0
    %357 = vdwg.mxu0
    %v359 = vsel %vm224, %v223, 0
    %v362 = vsel %vm224, %v185, 0
    %364 = vmatpush.bf16.xpose.msra.mxu0 0
    %365 = vmatpush.bf16.xpose.msra.mxu0 0
    %366 = vmatpush.bf16.xpose.msra.mxu0 0
    %367 = vmatpush.bf16.xpose.msra.mxu0 0
    %368 = vmatpush.bf16.xpose.msra.mxu0 0
    %369 = vmatpush.bf16.xpose.msra.mxu0 0
    %370 = vmatpush.bf16.xpose.msra.mxu0 0
    %371 = vmatpush.bf16.xpose.msra.mxu0 %v362
    %372 = vmatmul.bf16.gmra.mxu0 %v359
    %v373 = vpop.f32.mrf.mxu0
    %v374 = vadd.f32 0.0, %v373
    %v375 = vpop.f32.mrf.mxu0
    %376 = vdwg.mxu0
    %v377 = vld [vmem:[#allocation3] sm:$0xff]
    %v378 = vld [vmem:[#allocation3 + $0x8] sm:$0xff]
    %v379 = vld [vmem:[#allocation3 + $0x10] sm:$0xff]
    %v380 = vld [vmem:[#allocation3 + $0x18] sm:$0xff]
    %v381 = vld [vmem:[#allocation3 + $0x20] sm:$0xff]
    %v382 = vld [vmem:[#allocation3 + $0x28] sm:$0xff]
    %v383 = vld [vmem:[#allocation3 + $0x30] sm:$0xff]
    %v384 = vld [vmem:[#allocation3 + $0x38] sm:$0xff]
    %v385 = vsel %vm224, %v241, -inf
    %386 = vmax.xlane.f32.xlu0 %v385
    %v387 = vpop.xlane.xlu0 %386
    %v388 = vsel %vm224, %v260, -inf
    %389 = vmax.xlane.f32.xlu0 %v388
    %v390 = vpop.xlane.xlu0 %389
    %v391 = vsel %vm224, %v279, -inf
    %392 = vmax.xlane.f32.xlu0 %v391
    %v393 = vpop.xlane.xlu0 %392
    %v394 = vsel %vm224, %v298, -inf
    %395 = vmax.xlane.f32.xlu0 %v394
    %v396 = vpop.xlane.xlu0 %395
    %v397 = vsel %vm224, %v317, -inf
    %398 = vmax.xlane.f32.xlu0 %v397
    %v399 = vpop.xlane.xlu0 %398
    %v400 = vsel %vm224, %v336, -inf
    %401 = vmax.xlane.f32.xlu0 %v400
    %v402 = vpop.xlane.xlu0 %401
    %v403 = vsel %vm224, %v355, -inf
    %404 = vmax.xlane.f32.xlu0 %v403
    %v405 = vpop.xlane.xlu0 %404
    %v406 = vsel %vm224, %v374, -inf
    %407 = vmax.xlane.f32.xlu0 %v406
    %v408 = vpop.xlane.xlu0 %407
    %v409 = vmax.f32 %v377, %v387
    %v410 = vmax.f32 %v378, %v390
    %v411 = vmax.f32 %v379, %v393
    %v412 = vmax.f32 %v380, %v396
    %v413 = vmax.f32 %v381, %v399
    %v414 = vmax.f32 %v382, %v402
    %v415 = vmax.f32 %v383, %v405
    %v416 = vmax.f32 %v384, %v408
    %v417 = vsub.f32 %v377, %v409
    %v418 = vsub.f32 %v378, %v410
    %v419 = vsub.f32 %v379, %v411
    %v420 = vsub.f32 %v380, %v412
    %v421 = vsub.f32 %v381, %v413
    %v422 = vsub.f32 %v382, %v414
    %v423 = vsub.f32 %v383, %v415
    %v424 = vsub.f32 %v384, %v416
    %v425 = vmul.f32 %v417, 1.442695
    %v426 = vpow.pop %v425
    %v427 = vmul.f32 %v418, 1.442695
    %v428 = vpow.pop %v427
    %v429 = vmul.f32 %v419, 1.442695
    %v430 = vpow.pop %v429
    %v431 = vmul.f32 %v420, 1.442695
    %v432 = vpow.pop %v431
    %v433 = vmul.f32 %v421, 1.442695
    %v434 = vpow.pop %v433
    %v435 = vmul.f32 %v422, 1.442695
    %v436 = vpow.pop %v435
    %v437 = vmul.f32 %v423, 1.442695
    %v438 = vpow.pop %v437
    %v439 = vmul.f32 %v424, 1.442695
    %v440 = vpow.pop %v439
    %442 = vset.pattern.permute.xlu0 0
    %443 = vperm.xlu0 %442, %v409
    %v444 = vpop.permute.xlu0 %443
    %447 = vset.pattern.permute.xlu0 0
    %448 = vperm.xlu0 %447, %v410
    %v449 = vpop.permute.xlu0 %448
    %452 = vset.pattern.permute.xlu0 0
    %453 = vperm.xlu0 %452, %v411
    %v454 = vpop.permute.xlu0 %453
    %457 = vset.pattern.permute.xlu0 0
    %458 = vperm.xlu0 %457, %v412
    %v459 = vpop.permute.xlu0 %458
    %462 = vset.pattern.permute.xlu0 0
    %463 = vperm.xlu0 %462, %v413
    %v464 = vpop.permute.xlu0 %463
    %467 = vset.pattern.permute.xlu0 0
    %468 = vperm.xlu0 %467, %v414
    %v469 = vpop.permute.xlu0 %468
    %472 = vset.pattern.permute.xlu0 0
    %473 = vperm.xlu0 %472, %v415
    %v474 = vpop.permute.xlu0 %473
    %477 = vset.pattern.permute.xlu0 0
    %478 = vperm.xlu0 %477, %v416
    %v479 = vpop.permute.xlu0 %478
    %v481 = vsub.f32 %v241, %v444
    %v482 = vsub.f32 %v260, %v449
    %v483 = vsub.f32 %v279, %v454
    %v484 = vsub.f32 %v298, %v459
    %v485 = vsub.f32 %v317, %v464
    %v486 = vsub.f32 %v336, %v469
    %v487 = vsub.f32 %v355, %v474
    %v488 = vsub.f32 %v374, %v479
    %v489 = vpack.c.bf16 %v481, %v481
    %v490 = vpack.c.bf16 %v482, %v482
    %v491 = vpack.c.bf16 %v483, %v483
    %v492 = vpack.c.bf16 %v484, %v484
    %v493 = vpack.c.bf16 %v485, %v485
    %v494 = vpack.c.bf16 %v486, %v486
    %v495 = vpack.c.bf16 %v487, %v487
    %v496 = vpack.c.bf16 %v488, %v488
    %v497 = vunpack.c.l.bf16 %v489
    %v498 = vunpack.c.l.bf16 %v490
    %v499 = vunpack.c.l.bf16 %v491
    %v500 = vunpack.c.l.bf16 %v492
    %v501 = vunpack.c.l.bf16 %v493
    %v502 = vunpack.c.l.bf16 %v494
    %v503 = vunpack.c.l.bf16 %v495
    %v504 = vunpack.c.l.bf16 %v496
    %v505 = vmul.f32 %v497, 1.442695
    %v506 = vpow.pop %v505
    %v507 = vmul.f32 %v498, 1.442695
    %v508 = vpow.pop %v507
    %v509 = vmul.f32 %v499, 1.442695
    %v510 = vpow.pop %v509
    %v511 = vmul.f32 %v500, 1.442695
    %v512 = vpow.pop %v511
    %v513 = vmul.f32 %v501, 1.442695
    %v514 = vpow.pop %v513
    %v515 = vmul.f32 %v502, 1.442695
    %v516 = vpow.pop %v515
    %v517 = vmul.f32 %v503, 1.442695
    %v518 = vpow.pop %v517
    %v519 = vmul.f32 %v504, 1.442695
    %v520 = vpow.pop %v519
    %v521 = vpack.c.bf16 %v506, %v506
    %v522 = vpack.c.bf16 %v508, %v508
    %v523 = vpack.c.bf16 %v510, %v510
    %v524 = vpack.c.bf16 %v512, %v512
    %v525 = vpack.c.bf16 %v514, %v514
    %v526 = vpack.c.bf16 %v516, %v516
    %v527 = vpack.c.bf16 %v518, %v518
    %v528 = vpack.c.bf16 %v520, %v520
    %v529 = vld [vmem:[#allocation4] sm:$0xff]
    %v530 = vld [vmem:[#allocation4 + $0x8] sm:$0xff]
    %v531 = vld [vmem:[#allocation4 + $0x10] sm:$0xff]
    %v532 = vld [vmem:[#allocation4 + $0x18] sm:$0xff]
    %v533 = vld [vmem:[#allocation4 + $0x20] sm:$0xff]
    %v534 = vld [vmem:[#allocation4 + $0x28] sm:$0xff]
    %v535 = vld [vmem:[#allocation4 + $0x30] sm:$0xff]
    %v536 = vld [vmem:[#allocation4 + $0x38] sm:$0xff]
    %v537 = vmul.f32 %v426, %v529
    %v538 = vmul.f32 %v428, %v530
    %v539 = vmul.f32 %v430, %v531
    %v540 = vmul.f32 %v432, %v532
    %v541 = vmul.f32 %v434, %v533
    %v542 = vmul.f32 %v436, %v534
    %v543 = vmul.f32 %v438, %v535
    %v544 = vmul.f32 %v440, %v536
    %v545 = vunpack.c.l.bf16 %v521
    %v546 = vunpack.c.l.bf16 %v522
    %v547 = vunpack.c.l.bf16 %v523
    %v548 = vunpack.c.l.bf16 %v524
    %v549 = vunpack.c.l.bf16 %v525
    %v550 = vunpack.c.l.bf16 %v526
    %v551 = vunpack.c.l.bf16 %v527
    %v552 = vunpack.c.l.bf16 %v528
    %v553 = vsel %vm224, %v545, 0.0
    %554 = vadd.xlane.f32.xlu0 %v553
    %v555 = vpop.xlane.xlu0 %554
    %v556 = vsel %vm224, %v546, 0.0
    %557 = vadd.xlane.f32.xlu0 %v556
    %v558 = vpop.xlane.xlu0 %557
    %v559 = vsel %vm224, %v547, 0.0
    %560 = vadd.xlane.f32.xlu0 %v559
    %v561 = vpop.xlane.xlu0 %560
    %v562 = vsel %vm224, %v548, 0.0
    %563 = vadd.xlane.f32.xlu0 %v562
    %v564 = vpop.xlane.xlu0 %563
    %v565 = vsel %vm224, %v549, 0.0
    %566 = vadd.xlane.f32.xlu0 %v565
    %v567 = vpop.xlane.xlu0 %566
    %v568 = vsel %vm224, %v550, 0.0
    %569 = vadd.xlane.f32.xlu0 %v568
    %v570 = vpop.xlane.xlu0 %569
    %v571 = vsel %vm224, %v551, 0.0
    %572 = vadd.xlane.f32.xlu0 %v571
    %v573 = vpop.xlane.xlu0 %572
    %v574 = vsel %vm224, %v552, 0.0
    %575 = vadd.xlane.f32.xlu0 %v574
    %v576 = vpop.xlane.xlu0 %575
    %v577 = vadd.f32 %v537, %v555
    %v578 = vadd.f32 %v538, %v558
    %v579 = vadd.f32 %v539, %v561
    %v580 = vadd.f32 %v540, %v564
    %v581 = vadd.f32 %v541, %v567
    %v582 = vadd.f32 %v542, %v570
    %v583 = vadd.f32 %v543, %v573
    %v584 = vadd.f32 %v544, %v576
    %vm585 = vcmask 7168
    %586 = vst.msk [vmem:[#allocation4] sm:$0xff] %vm585, %v577
    %587 = vst.msk [vmem:[#allocation4 + $0x8] sm:$0xff] %vm585, %v578
    %588 = vst.msk [vmem:[#allocation4 + $0x10] sm:$0xff] %vm585, %v579
    %589 = vst.msk [vmem:[#allocation4 + $0x18] sm:$0xff] %vm585, %v580
    %590 = vst.msk [vmem:[#allocation4 + $0x20] sm:$0xff] %vm585, %v581
    %591 = vst.msk [vmem:[#allocation4 + $0x28] sm:$0xff] %vm585, %v582
    %592 = vst.msk [vmem:[#allocation4 + $0x30] sm:$0xff] %vm585, %v583
    %593 = vst.msk [vmem:[#allocation4 + $0x38] sm:$0xff] %vm585, %v584
    %v594 = vld [vmem:[#allocation5] sm:$0xff]
    %v595 = vld [vmem:[#allocation5 + $0x8] sm:$0xff]
    %v596 = vld [vmem:[#allocation5 + $0x10] sm:$0xff]
    %v597 = vld [vmem:[#allocation5 + $0x18] sm:$0xff]
    %v598 = vld [vmem:[#allocation5 + $0x20] sm:$0xff]
    %v599 = vld [vmem:[#allocation5 + $0x28] sm:$0xff]
    %v600 = vld [vmem:[#allocation5 + $0x30] sm:$0xff]
    %v601 = vld [vmem:[#allocation5 + $0x38] sm:$0xff]
    %603 = vset.pattern.permute.xlu0 0
    %604 = vperm.xlu0 %603, %v426
    %v605 = vpop.permute.xlu0 %604
    %608 = vset.pattern.permute.xlu0 0
    %609 = vperm.xlu0 %608, %v428
    %v610 = vpop.permute.xlu0 %609
    %613 = vset.pattern.permute.xlu0 0
    %614 = vperm.xlu0 %613, %v430
    %v615 = vpop.permute.xlu0 %614
    %618 = vset.pattern.permute.xlu0 0
    %619 = vperm.xlu0 %618, %v432
    %v620 = vpop.permute.xlu0 %619
    %623 = vset.pattern.permute.xlu0 0
    %624 = vperm.xlu0 %623, %v434
    %v625 = vpop.permute.xlu0 %624
    %628 = vset.pattern.permute.xlu0 0
    %629 = vperm.xlu0 %628, %v436
    %v630 = vpop.permute.xlu0 %629
    %633 = vset.pattern.permute.xlu0 0
    %634 = vperm.xlu0 %633, %v438
    %v635 = vpop.permute.xlu0 %634
    %638 = vset.pattern.permute.xlu0 0
    %639 = vperm.xlu0 %638, %v440
    %v640 = vpop.permute.xlu0 %639
    %v642 = vmul.f32 %v605, %v594
    %v643 = vmul.f32 %v610, %v595
    %v644 = vmul.f32 %v615, %v596
    %v645 = vmul.f32 %v620, %v597
    %v646 = vmul.f32 %v625, %v598
    %v647 = vmul.f32 %v630, %v599
    %v648 = vmul.f32 %v635, %v600
    %v649 = vmul.f32 %v640, %v601
    %v651 = vsel %vm224, %v521, 0
    %vm653 = vcmask 1043456
    %v655 = vsel %vm653, %v208, 0
    %657 = vmatpush.bf16.msra.mxu0 0
    %658 = vmatpush.bf16.msra.mxu0 0
    %659 = vmatpush.bf16.msra.mxu0 0
    %660 = vmatpush.bf16.msra.mxu0 0
    %661 = vmatpush.bf16.msra.mxu0 0
    %662 = vmatpush.bf16.msra.mxu0 0
    %663 = vmatpush.bf16.msra.mxu0 0
    %664 = vmatpush.bf16.msra.mxu0 %v655
    %665 = vmatmul.bf16.gmra.mxu0 %v651
    %v666 = vpop.f32.mrf.mxu0
    %v667 = vadd.f32 0.0, %v666
    %v668 = vpop.f32.mrf.mxu0
    %669 = vdwg.mxu0
    %v671 = vsel %vm224, %v522, 0
    %v674 = vsel %vm653, %v209, 0
    %676 = vmatpush.bf16.msra.mxu0 0
    %677 = vmatpush.bf16.msra.mxu0 0
    %678 = vmatpush.bf16.msra.mxu0 0
    %679 = vmatpush.bf16.msra.mxu0 0
    %680 = vmatpush.bf16.msra.mxu0 0
    %681 = vmatpush.bf16.msra.mxu0 0
    %682 = vmatpush.bf16.msra.mxu0 0
    %683 = vmatpush.bf16.msra.mxu0 %v674
    %684 = vmatmul.bf16.gmra.mxu0 %v671
    %v685 = vpop.f32.mrf.mxu0
    %v686 = vadd.f32 0.0, %v685
    %v687 = vpop.f32.mrf.mxu0
    %688 = vdwg.mxu0
    %v690 = vsel %vm224, %v523, 0
    %v693 = vsel %vm653, %v210, 0
    %695 = vmatpush.bf16.msra.mxu0 0
    %696 = vmatpush.bf16.msra.mxu0 0
    %697 = vmatpush.bf16.msra.mxu0 0
    %698 = vmatpush.bf16.msra.mxu0 0
    %699 = vmatpush.bf16.msra.mxu0 0
    %700 = vmatpush.bf16.msra.mxu0 0
    %701 = vmatpush.bf16.msra.mxu0 0
    %702 = vmatpush.bf16.msra.mxu0 %v693
    %703 = vmatmul.bf16.gmra.mxu0 %v690
    %v704 = vpop.f32.mrf.mxu0
    %v705 = vadd.f32 0.0, %v704
    %v706 = vpop.f32.mrf.mxu0
    %707 = vdwg.mxu0
    %v709 = vsel %vm224, %v524, 0
    %v712 = vsel %vm653, %v211, 0
    %714 = vmatpush.bf16.msra.mxu0 0
    %715 = vmatpush.bf16.msra.mxu0 0
    %716 = vmatpush.bf16.msra.mxu0 0
    %717 = vmatpush.bf16.msra.mxu0 0
    %718 = vmatpush.bf16.msra.mxu0 0
    %719 = vmatpush.bf16.msra.mxu0 0
    %720 = vmatpush.bf16.msra.mxu0 0
    %721 = vmatpush.bf16.msra.mxu0 %v712
    %722 = vmatmul.bf16.gmra.mxu0 %v709
    %v723 = vpop.f32.mrf.mxu0
    %v724 = vadd.f32 0.0, %v723
    %v725 = vpop.f32.mrf.mxu0
    %726 = vdwg.mxu0
    %v728 = vsel %vm224, %v525, 0
    %v731 = vsel %vm653, %v212, 0
    %733 = vmatpush.bf16.msra.mxu0 0
    %734 = vmatpush.bf16.msra.mxu0 0
    %735 = vmatpush.bf16.msra.mxu0 0
    %736 = vmatpush.bf16.msra.mxu0 0
    %737 = vmatpush.bf16.msra.mxu0 0
    %738 = vmatpush.bf16.msra.mxu0 0
    %739 = vmatpush.bf16.msra.mxu0 0
    %740 = vmatpush.bf16.msra.mxu0 %v731
    %741 = vmatmul.bf16.gmra.mxu0 %v728
    %v742 = vpop.f32.mrf.mxu0
    %v743 = vadd.f32 0.0, %v742
    %v744 = vpop.f32.mrf.mxu0
    %745 = vdwg.mxu0
    %v747 = vsel %vm224, %v526, 0
    %v750 = vsel %vm653, %v213, 0
    %752 = vmatpush.bf16.msra.mxu0 0
    %753 = vmatpush.bf16.msra.mxu0 0
    %754 = vmatpush.bf16.msra.mxu0 0
    %755 = vmatpush.bf16.msra.mxu0 0
    %756 = vmatpush.bf16.msra.mxu0 0
    %757 = vmatpush.bf16.msra.mxu0 0
    %758 = vmatpush.bf16.msra.mxu0 0
    %759 = vmatpush.bf16.msra.mxu0 %v750
    %760 = vmatmul.bf16.gmra.mxu0 %v747
    %v761 = vpop.f32.mrf.mxu0
    %v762 = vadd.f32 0.0, %v761
    %v763 = vpop.f32.mrf.mxu0
    %764 = vdwg.mxu0
    %v766 = vsel %vm224, %v527, 0
    %v769 = vsel %vm653, %v214, 0
    %771 = vmatpush.bf16.msra.mxu0 0
    %772 = vmatpush.bf16.msra.mxu0 0
    %773 = vmatpush.bf16.msra.mxu0 0
    %774 = vmatpush.bf16.msra.mxu0 0
    %775 = vmatpush.bf16.msra.mxu0 0
    %776 = vmatpush.bf16.msra.mxu0 0
    %777 = vmatpush.bf16.msra.mxu0 0
    %778 = vmatpush.bf16.msra.mxu0 %v769
    %779 = vmatmul.bf16.gmra.mxu0 %v766
    %v780 = vpop.f32.mrf.mxu0
    %v781 = vadd.f32 0.0, %v780
    %v782 = vpop.f32.mrf.mxu0
    %783 = vdwg.mxu0
    %v785 = vsel %vm224, %v528, 0
    %v788 = vsel %vm653, %v215, 0
    %790 = vmatpush.bf16.msra.mxu0 0
    %791 = vmatpush.bf16.msra.mxu0 0
    %792 = vmatpush.bf16.msra.mxu0 0
    %793 = vmatpush.bf16.msra.mxu0 0
    %794 = vmatpush.bf16.msra.mxu0 0
    %795 = vmatpush.bf16.msra.mxu0 0
    %796 = vmatpush.bf16.msra.mxu0 0
    %797 = vmatpush.bf16.msra.mxu0 %v788
    %798 = vmatmul.bf16.gmra.mxu0 %v785
    %v799 = vpop.f32.mrf.mxu0
    %v800 = vadd.f32 0.0, %v799
    %v801 = vpop.f32.mrf.mxu0
    %802 = vdwg.mxu0
    %v803 = vadd.f32 %v642, %v667
    %v804 = vadd.f32 %v643, %v686
    %v805 = vadd.f32 %v644, %v705
    %v806 = vadd.f32 %v645, %v724
    %v807 = vadd.f32 %v646, %v743
    %v808 = vadd.f32 %v647, %v762
    %v809 = vadd.f32 %v648, %v781
    %v810 = vadd.f32 %v649, %v800
    %811 = vst.msk [vmem:[#allocation5] sm:$0xff] %vm224, %v803
    %812 = vst.msk [vmem:[#allocation5 + $0x8] sm:$0xff] %vm224, %v804
    %813 = vst.msk [vmem:[#allocation5 + $0x10] sm:$0xff] %vm224, %v805
    %814 = vst.msk [vmem:[#allocation5 + $0x18] sm:$0xff] %vm224, %v806
    %815 = vst.msk [vmem:[#allocation5 + $0x20] sm:$0xff] %vm224, %v807
    %816 = vst.msk [vmem:[#allocation5 + $0x28] sm:$0xff] %vm224, %v808
    %817 = vst.msk [vmem:[#allocation5 + $0x30] sm:$0xff] %vm224, %v809
    %818 = vst.msk [vmem:[#allocation5 + $0x38] sm:$0xff] %vm224, %v810
    %819 = vst.msk [vmem:[#allocation3] sm:$0xff] %vm585, %v409
    %820 = vst.msk [vmem:[#allocation3 + $0x8] sm:$0xff] %vm585, %v410
    %821 = vst.msk [vmem:[#allocation3 + $0x10] sm:$0xff] %vm585, %v411
    %822 = vst.msk [vmem:[#allocation3 + $0x18] sm:$0xff] %vm585, %v412
    %823 = vst.msk [vmem:[#allocation3 + $0x20] sm:$0xff] %vm585, %v413
    %824 = vst.msk [vmem:[#allocation3 + $0x28] sm:$0xff] %vm585, %v414
    %825 = vst.msk [vmem:[#allocation3 + $0x30] sm:$0xff] %vm585, %v415
    %826 = vst.msk [vmem:[#allocation3 + $0x38] sm:$0xff] %vm585, %v416
    // Predicated region
    $region42: #{tpu_custom_call.1} parent=1 // pred_check
      %p827 = pneg %p85
    $region43: #{tpu_custom_call.1} parent=1 // pred_check_branch
      %829 = sbr.rel (%p827) target = $region45
    $region44: #{tpu_custom_call.1} parent=1 // pred_region
      %v830 = vld [vmem:[#allocation4] sm:$0xff]
      %v831 = vld [vmem:[#allocation4 + $0x8] sm:$0xff]
      %v832 = vld [vmem:[#allocation4 + $0x10] sm:$0xff]
      %v833 = vld [vmem:[#allocation4 + $0x18] sm:$0xff]
      %v834 = vld [vmem:[#allocation4 + $0x20] sm:$0xff]
      %v835 = vld [vmem:[#allocation4 + $0x28] sm:$0xff]
      %v836 = vld [vmem:[#allocation4 + $0x30] sm:$0xff]
      %v837 = vld [vmem:[#allocation4 + $0x38] sm:$0xff]
      %v838 = vrcp.pop %v830
      %v839 = vrcp.pop %v831
      %v840 = vrcp.pop %v832
      %v841 = vrcp.pop %v833
      %v842 = vrcp.pop %v834
      %v843 = vrcp.pop %v835
      %v844 = vrcp.pop %v836
      %v845 = vrcp.pop %v837
      %v846 = vld [vmem:[#allocation5] sm:$0xff]
      %v847 = vld [vmem:[#allocation5 + $0x8] sm:$0xff]
      %v848 = vld [vmem:[#allocation5 + $0x10] sm:$0xff]
      %v849 = vld [vmem:[#allocation5 + $0x18] sm:$0xff]
      %v850 = vld [vmem:[#allocation5 + $0x20] sm:$0xff]
      %v851 = vld [vmem:[#allocation5 + $0x28] sm:$0xff]
      %v852 = vld [vmem:[#allocation5 + $0x30] sm:$0xff]
      %v853 = vld [vmem:[#allocation5 + $0x38] sm:$0xff]
      %855 = vset.pattern.permute.xlu0 0
      %856 = vperm.xlu0 %855, %v838
      %v857 = vpop.permute.xlu0 %856
      %860 = vset.pattern.permute.xlu0 0
      %861 = vperm.xlu0 %860, %v839
      %v862 = vpop.permute.xlu0 %861
      %865 = vset.pattern.permute.xlu0 0
      %866 = vperm.xlu0 %865, %v840
      %v867 = vpop.permute.xlu0 %866
      %870 = vset.pattern.permute.xlu0 0
      %871 = vperm.xlu0 %870, %v841
      %v872 = vpop.permute.xlu0 %871
      %875 = vset.pattern.permute.xlu0 0
      %876 = vperm.xlu0 %875, %v842
      %v877 = vpop.permute.xlu0 %876
      %880 = vset.pattern.permute.xlu0 0
      %881 = vperm.xlu0 %880, %v843
      %v882 = vpop.permute.xlu0 %881
      %885 = vset.pattern.permute.xlu0 0
      %886 = vperm.xlu0 %885, %v844
      %v887 = vpop.permute.xlu0 %886
      %890 = vset.pattern.permute.xlu0 0
      %891 = vperm.xlu0 %890, %v845
      %v892 = vpop.permute.xlu0 %891
      %v894 = vmul.f32 %v846, %v857
      %v895 = vmul.f32 %v847, %v862
      %v896 = vmul.f32 %v848, %v867
      %v897 = vmul.f32 %v849, %v872
      %v898 = vmul.f32 %v850, %v877
      %v899 = vmul.f32 %v851, %v882
      %v900 = vmul.f32 %v852, %v887
      %v901 = vmul.f32 %v853, %v892
      %904 = vrot.lane.b32.xlu0 %v895, 8
      %v905 = vpop.permute.xlu0 %904
      %906 = vrot.lane.b32.xlu0 %v899, 8
      %v907 = vpop.permute.xlu0 %906
      %912 = vrot.lane.b32.xlu0 %v896, 16
      %v913 = vpop.permute.xlu0 %912
      %914 = vrot.lane.b32.xlu0 %v900, 16
      %v915 = vpop.permute.xlu0 %914
      %920 = vrot.lane.b32.xlu0 %v897, 24
      %v921 = vpop.permute.xlu0 %920
      %922 = vrot.lane.b32.xlu0 %v901, 24
      %v923 = vpop.permute.xlu0 %922
      %v926 = vsel %vm224, %v894, %v905
      %v927 = vsel %vm224, %v898, %v907
      %vm928 = vcmask 130048
      %v929 = vsel %vm928, %v926, %v913
      %v930 = vsel %vm928, %v927, %v915
      %vm931 = vcmask 195584
      %v932 = vsel %vm931, %v929, %v921
      %v933 = vsel %vm931, %v930, %v923
      %v934 = vpack.c.bf16 %v933, %v932
      %v935 = vld [vmem:[#allocation12] sm:$0xff]
      %v936 = vld [vmem:[#allocation12 + $0x8] sm:$0xff]
      %v937 = vld [vmem:[#allocation12 + $0x10] sm:$0xff]
      %v938 = vld [vmem:[#allocation12 + $0x18] sm:$0xff]
      %v939 = vpack.c.bf16 %v936, %v935
      %v940 = vpack.c.bf16 %v938, %v937
      %v941 = vld [vmem:[%s4] sm:$0x1]
      %v943 = vperm.slane %v941, 0
      %vm945 = vcmask 261120
      %v947 = vsel %vm945, %v934, 0
      %949 = vmatpush.bf16.msra.mxu0 0
      %950 = vmatpush.bf16.msra.mxu0 0
      %951 = vmatpush.bf16.msra.mxu0 0
      %952 = vmatpush.bf16.msra.mxu0 0
      %953 = vmatpush.bf16.msra.mxu0 0
      %954 = vmatpush.bf16.msra.mxu0 0
      %955 = vmatpush.bf16.msra.mxu0 %v940
      %956 = vmatpush.bf16.msra.mxu0 %v939
      %957 = vmatmul.bf16.gmra.mxu0 %v947
      %v958 = vpop.f32.mrf.mxu0
      %v959 = vadd.f32 %v943, %v958
      %v960 = vpop.f32.mrf.mxu0
      %v961 = vadd.f32 %v943, %v960
      %962 = vdwg.mxu0
      %963 = vst.msk [vmem:[#allocation14] sm:$0xff] %vm945, %v959
      %964 = vst.msk [vmem:[#allocation14 + $0x8] sm:$0xff] %vm945, %v961
    $region45: #{tpu_custom_call.1} parent=1 // pred_fallthru
      _
    // Predicated region
    $region46: #{tpu_custom_call.1} parent=1 // pred_check
      _
    $region47: #{tpu_custom_call.1} parent=1 // pred_check_branch
      %966 = sbr.rel (0) target = $region49
    $region48: #{tpu_custom_call.1} parent=1 // pred_region
      %968 = vsyncadd [#allocation8], 0
      %s969 = sshll.u32 [#allocation14], 4
      %s970 = int_to_ptr.vmem [resolvable:$true] %s969
      %s971 = sshll.u32 %s5, 4
      %s972 = int_to_ptr.hbm [resolvable:$true] %s971
      %977 = dma.vmem_to_hbm [thread:$0]  %s970, 256, %s972, [#allocation8], 128, 128, 8
    $region49: #{tpu_custom_call.1} parent=1 // pred_fallthru
      _
    // Predicated region
    $region50: #{tpu_custom_call.1} parent=1 // pred_check
      _
    $region51: #{tpu_custom_call.1} parent=1 // pred_check_branch
      %979 = sbr.rel (0) target = $region53
    $region52: #{tpu_custom_call.1} parent=1 // pred_region
      %981 = dma.done [#allocation8], 256
    $region53: #{tpu_custom_call.1} parent=1 // pred_fallthru
      _
    %982 = vsyncpa [#allocation7], 1
    %983 = vsyncpa [#allocation10], 1
    %984 = vsyncpa [#allocation13], 1
    %985 = vsyncpa [#allocation8], 1

</llo_original>
